<compile_context>
chip_gen: v7x
topology: tpu7x:2x2x1
jax: 0.10.0
libtpu: 0.0.40
codegen_flags: <defaults>
</compile_context>

<pallas_src>
import jax
import jax.numpy as jnp
from jax.experimental import pallas as pl
from jax.experimental.pallas import tpu as pltpu

NEG_SLOPE = 0.2


# ----------------------------------------------------------------------------
# Pallas kernel: tiled GEMM + fused per-channel scale/shift + optional LeakyReLU
# ----------------------------------------------------------------------------
def _gemm_bn_act_kernel(p_ref, w_ref, scale_ref, shift_ref, mask_ref, o_ref):
    # p_ref: (TM, Kpad)   w_ref: (Kpad, Cpad)
    # scale/shift/mask: (1, Cpad) f32   o_ref: (TM, Cpad) f32
    acc = jnp.dot(p_ref[...], w_ref[...], preferred_element_type=jnp.float32)
    y = acc * scale_ref[...] + shift_ref[...]          # folded BN (f32)
    y_act = jnp.where(y >= 0, y, NEG_SLOPE * y)        # LeakyReLU(0.2)
    o_ref[...] = jnp.where(mask_ref[...] > 0, y_act, y).astype(o_ref.dtype)


def _round_up(x, m):
    return (x + m - 1) // m * m


def _gemm_bn_act(patches, w, scale, shift, act_mask, *,
                 compute_dtype=jnp.bfloat16, tm_max=512):
    """(M, K) @ (K, C) -> (M, C) with fused y*scale+shift and per-column
    optional LeakyReLU(0.2).  Returns float32 (M, C)."""
    m, k = patches.shape
    _, c = w.shape
    kpad = _round_up(k, 128)            # lane-dense contraction dim
    cpad = _round_up(c, 128)            # lane-dense output dim (unmasked stores)
    tm = min(tm_max, _round_up(m, 32))  # multiple of 32 (covers bf16 (16,128) tile)
    mpad = _round_up(m, tm)
    grid = mpad // tm

    in_bytes = jnp.dtype(compute_dtype).itemsize
    p = jnp.zeros((mpad, kpad), compute_dtype).at[:m, :k].set(
        patches.astype(compute_dtype))
    wq = jnp.zeros((kpad, cpad), compute_dtype).at[:k, :c].set(
        w.astype(compute_dtype))
    sc = jnp.ones((1, cpad), jnp.float32).at[0, :c].set(scale.astype(jnp.float32))
    sh = jnp.zeros((1, cpad), jnp.float32).at[0, :c].set(shift.astype(jnp.float32))
    mk = jnp.zeros((1, cpad), jnp.float32).at[0, :c].set(act_mask.astype(jnp.float32))

    out = pl.pallas_call(
        _gemm_bn_act_kernel,
        out_shape=jax.ShapeDtypeStruct((mpad, cpad), jnp.float32),
        grid=(grid,),
        in_specs=[
            pl.BlockSpec((tm, kpad), lambda i: (i, 0)),     # patches: tiled over M
            pl.BlockSpec((kpad, cpad), lambda i: (0, 0)),   # weight: resident
            pl.BlockSpec((1, cpad), lambda i: (0, 0)),      # scale: resident
            pl.BlockSpec((1, cpad), lambda i: (0, 0)),      # shift: resident
            pl.BlockSpec((1, cpad), lambda i: (0, 0)),      # act mask: resident
        ],
        out_specs=pl.BlockSpec((tm, cpad), lambda i: (i, 0)),
        compiler_params=pltpu.CompilerParams(
            dimension_semantics=("parallel",),              # megacore split on v7x
            vmem_limit_bytes=32 * 1024 * 1024,              # safe on v5e/v6e/v7x
        ),
        cost_estimate=pl.CostEstimate(
            flops=2 * mpad * kpad * cpad,
            transcendentals=0,
            bytes_accessed=(mpad * kpad + kpad * cpad) * in_bytes + mpad * cpad * 4,
        ),
    )(p, wq, sc, sh, mk)
    return out[:m, :c]


# ----------------------------------------------------------------------------
# Wrapper glue: im2col (NHWC, columns ordered (C, kh, kw) to match OIHW flatten)
# ----------------------------------------------------------------------------
def _im2col_nhwc(x, k, stride, padding):
    n, h, w, c = x.shape
    xp = jnp.pad(x, ((0, 0), (padding, padding), (padding, padding), (0, 0)))
    ho = (h + 2 * padding - k) // stride + 1
    wo = (w + 2 * padding - k) // stride + 1
    cols = []
    for dy in range(k):
        for dx in range(k):
            cols.append(
                xp[:, dy: dy + (ho - 1) * stride + 1: stride,
                       dx: dx + (wo - 1) * stride + 1: stride, :])  # (N,Ho,Wo,C)
    p = jnp.stack(cols, axis=-1)                   # (N, Ho, Wo, C, k*k)
    p = p.reshape(n * ho * wo, c * k * k)
    return p, ho, wo


# ----------------------------------------------------------------------------
# ResBlock_half forward
# ----------------------------------------------------------------------------
def res_block_half(x, params, *, eps=1e-5, compute_dtype=jnp.bfloat16):
    """x: (N, C, H, W) float32 (NCHW).  Returns (N, 2C, H//2, W//2) float32."""
    n, dim, h, w = x.shape
    x_nhwc = jnp.transpose(x, (0, 2, 3, 1))

    # ---- stage 1: conv1 (3x3 s2 p1, no bias) + BN1 + LeakyReLU, fused with the
    #      3x3/s2 average-pool residual (same im2col windows). ----------------
    patches1, ho, wo = _im2col_nhwc(x_nhwc, 3, 2, 1)            # (M, dim*9)
    k1 = dim * 9
    w1_2d = params["w1"].reshape(dim, k1).T                      # (K1, dim)
    # pooling columns: sum the 3x3 window per channel (scale applies the 1/9)
    pool_w = jnp.kron(jnp.eye(dim, dtype=jnp.float32),
                      jnp.ones((9, 1), jnp.float32))             # (K1, dim)
    w1_aug = jnp.concatenate([w1_2d, pool_w], axis=1)            # (K1, 2*dim)

    scale1_bn = params["gamma1"] / jnp.sqrt(params["var1"] + eps)
    shift1_bn = params["beta1"] - params["mean1"] * scale1_bn
    scale1 = jnp.concatenate([scale1_bn, jnp.full((dim,), 1.0 / 9.0, jnp.float32)])
    shift1 = jnp.concatenate([shift1_bn, jnp.zeros((dim,), jnp.float32)])
    mask1 = jnp.concatenate([jnp.ones((dim,), jnp.float32),      # lrelu on conv cols
                             jnp.zeros((dim,), jnp.float32)])    # not on residual

    y1 = _gemm_bn_act(patches1, w1_aug, scale1, shift1, mask1,
                      compute_dtype=compute_dtype)               # (M, 2*dim) f32
    h1 = y1[:, :dim]                                             # LReLU(BN1(conv1(x)))
    residual = y1[:, dim:]                                       # avg_pool2d(x,3,2,1)
    h1_nhwc = h1.reshape(n, ho, wo, dim)

    # ---- stage 2: conv2 (3x3 s1 p1, no bias) + BN2 (no activation); residual
    #      passes through identity columns so the output is already the
    #      channel-concatenated result. ---------------------------------------
    patches2, _, _ = _im2col_nhwc(h1_nhwc, 3, 1, 1)              # (M, dim*9)
    k2 = dim * 9
    patches2_aug = jnp.concatenate([patches2, residual], axis=1)  # (M, K2+dim)
    w2_2d = params["w2"].reshape(dim, k2).T
    w2_aug = jnp.zeros((k2 + dim, 2 * dim), jnp.float32)
    w2_aug = w2_aug.at[:k2, :dim].set(w2_2d)
    w2_aug = w2_aug.at[k2:, dim:].set(jnp.eye(dim, dtype=jnp.float32))

    scale2_bn = params["gamma2"] / jnp.sqrt(params["var2"] + eps)
    shift2_bn = params["beta2"] - params["mean2"] * scale2_bn
    scale2 = jnp.concatenate([scale2_bn, jnp.ones((dim,), jnp.float32)])
    shift2 = jnp.concatenate([shift2_bn, jnp.zeros((dim,), jnp.float32)])
    mask2 = jnp.zeros((2 * dim,), jnp.float32)                   # activation='none'

    y2 = _gemm_bn_act(patches2_aug, w2_aug, scale2, shift2, mask2,
                      compute_dtype=compute_dtype)               # (M, 2*dim) f32

    # NCHW only because the PyTorch module's interface requires it.
    out = y2.reshape(n, ho, wo, 2 * dim).transpose(0, 3, 1, 2)
    return out


# ----------------------------------------------------------------------------
# Pure-JAX float32 reference
# ----------------------------------------------------------------------------
def _reference(x, params, *, eps=1e-5):
    def bn(y, g, b, m, v):
        return ((y - m[None, :, None, None])
                / jnp.sqrt(v + eps)[None, :, None, None]
                * g[None, :, None, None] + b[None, :, None, None])

    y = jax.lax.conv_general_dilated(
        x, params["w1"], (2, 2), ((1, 1), (1, 1)),
        dimension_numbers=("NCHW", "OIHW", "NCHW"))
    y = bn(y, params["gamma1"], params["beta1"], params["mean1"], params["var1"])
    y = jnp.where(y >= 0, y, NEG_SLOPE * y)
    z = jax.lax.conv_general_dilated(
        y, params["w2"], (1, 1), ((1, 1), (1, 1)),
        dimension_numbers=("NCHW", "OIHW", "NCHW"))
    z = bn(z, params["gamma2"], params["beta2"], params["mean2"], params["var2"])
    # avg_pool2d(x, 3, 2, 1) with count_include_pad=True (PyTorch default)
    xp = jnp.pad(x, ((0, 0), (0, 0), (1, 1), (1, 1)))
    res = jax.lax.reduce_window(xp, 0.0, jax.lax.add,
                                (1, 1, 3, 3), (1, 1, 2, 2), "VALID") / 9.0
    return jnp.concatenate([z, res], axis=1)


if __name__ == "__main__":
    key = jax.random.PRNGKey(0)
    ks = jax.random.split(key, 11)

    N, DIM, H, W = 2, 4, 16, 16
    fan_in = DIM * 9
    bound = 1.0 / (fan_in ** 0.5)

    x = jax.random.normal(ks[0], (N, DIM, H, W), dtype=jnp.float32)
    params = {
        "w1": jax.random.uniform(ks[1], (DIM, DIM, 3, 3), jnp.float32, -bound, bound),
        "gamma1": jax.random.uniform(ks[2], (DIM,), jnp.float32, 0.8, 1.2),
        "beta1": 0.05 * jax.random.normal(ks[3], (DIM,), jnp.float32),
        "mean1": 0.05 * jax.random.normal(ks[4], (DIM,), jnp.float32),
        "var1": jax.random.uniform(ks[5], (DIM,), jnp.float32, 0.8, 1.2),
        "w2": jax.random.uniform(ks[6], (DIM, DIM, 3, 3), jnp.float32, -bound, bound),
        "gamma2": jax.random.uniform(ks[7], (DIM,), jnp.float32, 0.8, 1.2),
        "beta2": 0.05 * jax.random.normal(ks[8], (DIM,), jnp.float32),
        "mean2": 0.05 * jax.random.normal(ks[9], (DIM,), jnp.float32),
        "var2": jax.random.uniform(ks[10], (DIM,), jnp.float32, 0.8, 1.2),
    }

    # Default (bf16 GEMM operands, f32 accumulate) path.
    out = res_block_half(x, params)
    out = jax.block_until_ready(out)
    assert out.shape == (N, 2 * DIM, H // 2, W // 2), out.shape

    ref = _reference(x, params)
    # bf16 operand quantization => ~1e-2-level noise vs the f32 reference.
    assert jnp.allclose(out, ref, atol=1e-1, rtol=1e-1), "bf16 path mismatch"

    # f32 operand path exercises the same kernel/layout logic and must match tightly.
    out_f32 = res_block_half(x, params, compute_dtype=jnp.float32)
    out_f32 = jax.block_until_ready(out_f32)
    assert jnp.allclose(out_f32, ref, atol=1e-4, rtol=1e-4), "f32 path mismatch"

    print("KERNEL_OK")
</pallas_src>

<mosaic_0001>
module attributes {stable_mosaic.version = 11 : i64} {
  func.func @_gemm_bn_act_kernel(%arg0: i32, %arg1: memref<128x128xbf16, #tpu.memory_space<vmem>>, %arg2: memref<128x128xbf16, #tpu.memory_space<vmem>>, %arg3: memref<1x128xf32, #tpu.memory_space<vmem>>, %arg4: memref<1x128xf32, #tpu.memory_space<vmem>>, %arg5: memref<1x128xf32, #tpu.memory_space<vmem>>, %arg6: memref<128x128xf32, #tpu.memory_space<vmem>>) attributes {dimension_semantics = [#tpu.dimension_semantics<parallel>], iteration_bounds = array<i64: 1>, scalar_prefetch = 0 : i64, scratch_operands = 0 : i64, tpu.core_type = #tpu.core_type<tc>, window_params = [{transform_indices = @transform_0, window_bounds = array<i64: 128, 128>}, {pipeline_mode = #tpu.pipeline_mode<synchronous>, transform_indices = @transform_1, window_bounds = array<i64: 128, 128>}, {pipeline_mode = #tpu.pipeline_mode<synchronous>, transform_indices = @transform_2, window_bounds = array<i64: 1, 128>}, {pipeline_mode = #tpu.pipeline_mode<synchronous>, transform_indices = @transform_3, window_bounds = array<i64: 1, 128>}, {pipeline_mode = #tpu.pipeline_mode<synchronous>, transform_indices = @transform_4, window_bounds = array<i64: 1, 128>}, {transform_indices = @transform_5, window_bounds = array<i64: 128, 128>}]} {
    %c0 = arith.constant 0 : index
    %c0_0 = arith.constant 0 : index
    %0 = vector.load %arg1[%c0, %c0_0] : memref<128x128xbf16, #tpu.memory_space<vmem>>, vector<128x128xbf16>
    %c0_1 = arith.constant 0 : index
    %c0_2 = arith.constant 0 : index
    %1 = vector.load %arg2[%c0_1, %c0_2] : memref<128x128xbf16, #tpu.memory_space<vmem>>, vector<128x128xbf16>
    %cst = arith.constant dense<0.000000e+00> : vector<128x128xf32>
    %2 = tpu.matmul %0, %1, %cst {dimension_numbers = #tpu.dot_dimension_numbers<[1], [0], [0], [1], [0, 0, 1, 1], [], []>} : vector<128x128xbf16>, vector<128x128xbf16>, vector<128x128xf32> -> vector<128x128xf32>
    %c0_3 = arith.constant 0 : index
    %c0_4 = arith.constant 0 : index
    %3 = vector.load %arg3[%c0_3, %c0_4] : memref<1x128xf32, #tpu.memory_space<vmem>>, vector<1x128xf32>
    %4 = vector.broadcast %3 : vector<1x128xf32> to vector<128x128xf32>
    %5 = arith.mulf %2, %4 : vector<128x128xf32>
    %c0_5 = arith.constant 0 : index
    %c0_6 = arith.constant 0 : index
    %6 = vector.load %arg4[%c0_5, %c0_6] : memref<1x128xf32, #tpu.memory_space<vmem>>, vector<1x128xf32>
    %7 = vector.broadcast %6 : vector<1x128xf32> to vector<128x128xf32>
    %8 = arith.addf %5, %7 : vector<128x128xf32>
    %cst_7 = arith.constant 0.000000e+00 : f32
    %9 = vector.broadcast %cst_7 : f32 to vector<128x128xf32>
    %10 = arith.cmpf oge, %8, %9 : vector<128x128xf32>
    %cst_8 = arith.constant 2.000000e-01 : f32
    %11 = vector.broadcast %cst_8 : f32 to vector<128x128xf32>
    %12 = arith.mulf %11, %8 : vector<128x128xf32>
    %13 = arith.select %10, %8, %12 : vector<128x128xi1>, vector<128x128xf32>
    %c0_9 = arith.constant 0 : index
    %c0_10 = arith.constant 0 : index
    %14 = vector.load %arg5[%c0_9, %c0_10] : memref<1x128xf32, #tpu.memory_space<vmem>>, vector<1x128xf32>
    %cst_11 = arith.constant 0.000000e+00 : f32
    %15 = vector.broadcast %cst_11 : f32 to vector<1x128xf32>
    %16 = arith.cmpf ogt, %14, %15 : vector<1x128xf32>
    %17 = vector.shape_cast %16 : vector<1x128xi1> to vector<1x128xi1>
    %18 = vector.broadcast %17 : vector<1x128xi1> to vector<128x128xi1>
    %19 = arith.select %18, %13, %8 : vector<128x128xi1>, vector<128x128xf32>
    %c0_12 = arith.constant 0 : index
    %c0_13 = arith.constant 0 : index
    %20 = vector.load %arg6[%c0_12, %c0_13] : memref<128x128xf32, #tpu.memory_space<vmem>>, vector<128x128xf32>
    tpu.vector_store %arg6[%c0_12, %c0_13], %19 {strides = array<i32>} : memref<128x128xf32, #tpu.memory_space<vmem>>, vector<128x128xf32>,
    return
  }
  func.func @transform_0(%arg0: i32) -> (i32, i32) {
    %c0_i32 = arith.constant 0 : i32
    %c0_i32_0 = arith.constant 0 : i32
    return %arg0, %c0_i32 : i32, i32
  }
  func.func @transform_1(%arg0: i32) -> (i32, i32) {
    %c0_i32 = arith.constant 0 : i32
    %c0_i32_0 = arith.constant 0 : i32
    %c0_i32_1 = arith.constant 0 : i32
    return %c0_i32, %c0_i32_0 : i32, i32
  }
  func.func @transform_2(%arg0: i32) -> (i32, i32) {
    %c0_i32 = arith.constant 0 : i32
    %c0_i32_0 = arith.constant 0 : i32
    %c0_i32_1 = arith.constant 0 : i32
    return %c0_i32, %c0_i32_0 : i32, i32
  }
  func.func @transform_3(%arg0: i32) -> (i32, i32) {
    %c0_i32 = arith.constant 0 : i32
    %c0_i32_0 = arith.constant 0 : i32
    %c0_i32_1 = arith.constant 0 : i32
    return %c0_i32, %c0_i32_0 : i32, i32
  }
  func.func @transform_4(%arg0: i32) -> (i32, i32) {
    %c0_i32 = arith.constant 0 : i32
    %c0_i32_0 = arith.constant 0 : i32
    %c0_i32_1 = arith.constant 0 : i32
    return %c0_i32, %c0_i32_0 : i32, i32
  }
  func.func @transform_5(%arg0: i32) -> (i32, i32) {
    %c0_i32 = arith.constant 0 : i32
    %c0_i32_0 = arith.constant 0 : i32
    return %arg0, %c0_i32 : i32, i32
  }
}

</mosaic_0001>

<llo_original>
// kernel: tpu_custom_call.1
$region0: #{tpu_custom_call.1}
  #allocation0 [shape = 'u32[]', space=smem, size = 0x4, offset = 0x4, fixed_abs, tag = 'smem constant byte address 0x4 - core index']
  #allocation1 [shape = 'u32[144,128]{1,0:T(1,128)}', space=vmem, size = 0x12000, scoped, tag = 'internal scratch']
  %s0 = inlined_call_operand.hbm [shape: bf16[128,128], index: 0, kind: input, shape index: {}]
  %s1 = inlined_call_operand.hbm [shape: bf16[128,128], index: 1, kind: input, shape index: {}]
  %s2 = inlined_call_operand.vmem [shape: f32[1,128], index: 2, kind: input, shape index: {}]
  %s3 = inlined_call_operand.vmem [shape: f32[1,128], index: 3, kind: input, shape index: {}]
  %s4 = inlined_call_operand.vmem [shape: f32[1,128], index: 4, kind: input, shape index: {}]
  %s5 = inlined_call_operand.hbm [shape: f32[128,128], index: 5, kind: output, shape index: {}]
  %s6 = sld [smem:[#allocation0]]
  $region38: #{tpu_custom_call.1} parent=0
    _
  %s8 = ssub.s32 1, %s6
  %s9 = scalar_select 0, %s8, %s6
  $region1: #{tpu_custom_call.1} parent=0
    #allocation2 [shape = 'u8[32768]{0}', space=vmem, size = 0x8000, scoped, tag = 'input window, operand 0, single buffered']
    #allocation3 [shape = 's32[1]{0}', space=sflag, size = 0x4, scoped, tag = 'scoped memory for tpu_custom_call.1']
    #allocation4 [shape = 's32[1]{0}', space=sflag, size = 0x4, scoped, tag = 'scoped memory for tpu_custom_call.1']
    #allocation5 [shape = 'u8[32768]{0}', space=vmem, size = 0x8000, scoped, tag = 'input window, operand 1, single buffered']
    #allocation6 [shape = 's32[1]{0}', space=sflag, size = 0x4, scoped, tag = 'scoped memory for tpu_custom_call.1']
    #allocation7 [shape = 'u8[65536]{0}', space=vmem, size = 0x10000, scoped, tag = 'output window, operand 0, single buffered']
    %10 = vsyncpa [#allocation3], 0
    %11 = vsyncpa [#allocation6], 0
    %12 = vsyncpa [#allocation4], 0
    // Predicated region
    $region2: #{tpu_custom_call.1} parent=1 // pred_check
      _
    $region3: #{tpu_custom_call.1} parent=1 // pred_check_branch
      %14 = sbr.rel (0) target = $region5
    $region4: #{tpu_custom_call.1} parent=1 // pred_region
      %s16 = ssub.s32 1024, 1024
      %17 = vsyncadd [#allocation3], %s16
      %s18 = sshll.u32 [#allocation2], 4
      %s19 = int_to_ptr.vmem [resolvable:$true] %s18
      %24 = dma.hbm_to_vmem [thread:$0]  %s0, 1024, %s19, [#allocation3], 64, 64, 4
    $region5: #{tpu_custom_call.1} parent=1 // pred_fallthru
      _
    // Predicated region
    $region6: #{tpu_custom_call.1} parent=1 // pred_check
      _
    $region7: #{tpu_custom_call.1} parent=1 // pred_check_branch
      %26 = sbr.rel (0) target = $region9
    $region8: #{tpu_custom_call.1} parent=1 // pred_region
      %s28 = ssub.s32 1024, 1024
      %29 = vsyncadd [#allocation6], %s28
      %s30 = sshll.u32 [#allocation5], 4
      %s31 = int_to_ptr.vmem [resolvable:$true] %s30
      %36 = dma.hbm_to_vmem [thread:$0]  %s1, 1024, %s31, [#allocation6], 64, 64, 4
    $region9: #{tpu_custom_call.1} parent=1 // pred_fallthru
      _
    // Predicated region
    $region10: #{tpu_custom_call.1} parent=1 // pred_check
      _
    $region11: #{tpu_custom_call.1} parent=1 // pred_check_branch
      %38 = sbr.rel (0) target = $region13
    $region12: #{tpu_custom_call.1} parent=1 // pred_region
      _
    $region13: #{tpu_custom_call.1} parent=1 // pred_fallthru
      _
    // Predicated region
    $region14: #{tpu_custom_call.1} parent=1 // pred_check
      _
    $region15: #{tpu_custom_call.1} parent=1 // pred_check_branch
      %40 = sbr.rel (0) target = $region17
    $region16: #{tpu_custom_call.1} parent=1 // pred_region
      _
    $region17: #{tpu_custom_call.1} parent=1 // pred_fallthru
      _
    // Predicated region
    $region18: #{tpu_custom_call.1} parent=1 // pred_check
      _
    $region19: #{tpu_custom_call.1} parent=1 // pred_check_branch
      %42 = sbr.rel (0) target = $region21
    $region20: #{tpu_custom_call.1} parent=1 // pred_region
      _
    $region21: #{tpu_custom_call.1} parent=1 // pred_fallthru
      _
    // Predicated region
    $region22: #{tpu_custom_call.1} parent=1 // pred_check
      _
    $region23: #{tpu_custom_call.1} parent=1 // pred_check_branch
      %44 = sbr.rel (0) target = $region25
    $region24: #{tpu_custom_call.1} parent=1 // pred_region
      %45 = dma.done [#allocation3], 1024
    $region25: #{tpu_custom_call.1} parent=1 // pred_fallthru
      _
    // Predicated region
    $region26: #{tpu_custom_call.1} parent=1 // pred_check
      _
    $region27: #{tpu_custom_call.1} parent=1 // pred_check_branch
      %47 = sbr.rel (0) target = $region29
    $region28: #{tpu_custom_call.1} parent=1 // pred_region
      %48 = dma.done [#allocation6], 1024
    $region29: #{tpu_custom_call.1} parent=1 // pred_fallthru
      _
    %v50 = vld [vmem:[#allocation2] sm:$0xf]
    %v51 = vld [vmem:[#allocation2 + $0x4] sm:$0xf]
    %v52 = vld [vmem:[#allocation2 + $0x8] sm:$0xf]
    %v53 = vld [vmem:[#allocation2 + $0xc] sm:$0xf]
    %v54 = vld [vmem:[#allocation2 + $0x10] sm:$0xf]
    %v55 = vld [vmem:[#allocation2 + $0x14] sm:$0xf]
    %v56 = vld [vmem:[#allocation2 + $0x18] sm:$0xf]
    %v57 = vld [vmem:[#allocation2 + $0x1c] sm:$0xf]
    %v58 = vld [vmem:[#allocation2 + $0x20] sm:$0xf]
    %v59 = vld [vmem:[#allocation2 + $0x24] sm:$0xf]
    %v60 = vld [vmem:[#allocation2 + $0x28] sm:$0xf]
    %v61 = vld [vmem:[#allocation2 + $0x2c] sm:$0xf]
    %v62 = vld [vmem:[#allocation2 + $0x30] sm:$0xf]
    %v63 = vld [vmem:[#allocation2 + $0x34] sm:$0xf]
    %v64 = vld [vmem:[#allocation2 + $0x38] sm:$0xf]
    %v65 = vld [vmem:[#allocation2 + $0x3c] sm:$0xf]
    %v66 = vld [vmem:[#allocation5] sm:$0xf]
    %v67 = vld [vmem:[#allocation5 + $0x4] sm:$0xf]
    %v68 = vld [vmem:[#allocation5 + $0x8] sm:$0xf]
    %v69 = vld [vmem:[#allocation5 + $0xc] sm:$0xf]
    %v70 = vld [vmem:[#allocation5 + $0x10] sm:$0xf]
    %v71 = vld [vmem:[#allocation5 + $0x14] sm:$0xf]
    %v72 = vld [vmem:[#allocation5 + $0x18] sm:$0xf]
    %v73 = vld [vmem:[#allocation5 + $0x1c] sm:$0xf]
    %v74 = vld [vmem:[#allocation5 + $0x20] sm:$0xf]
    %v75 = vld [vmem:[#allocation5 + $0x24] sm:$0xf]
    %v76 = vld [vmem:[#allocation5 + $0x28] sm:$0xf]
    %v77 = vld [vmem:[#allocation5 + $0x2c] sm:$0xf]
    %v78 = vld [vmem:[#allocation5 + $0x30] sm:$0xf]
    %v79 = vld [vmem:[#allocation5 + $0x34] sm:$0xf]
    %v80 = vld [vmem:[#allocation5 + $0x38] sm:$0xf]
    %v81 = vld [vmem:[#allocation5 + $0x3c] sm:$0xf]
    %v98 = vunpack.c.l.b16 %v50
    %v99 = vunpack.c.l.b16 %v51
    %v100 = vunpack.c.l.b16 %v52
    %v101 = vunpack.c.l.b16 %v53
    %v102 = vunpack.c.l.b16 %v54
    %v103 = vunpack.c.l.b16 %v55
    %v104 = vunpack.c.l.b16 %v56
    %v105 = vunpack.c.l.b16 %v57
    %v106 = vunpack.c.l.b16 %v58
    %v107 = vunpack.c.l.b16 %v59
    %v108 = vunpack.c.l.b16 %v60
    %v109 = vunpack.c.l.b16 %v61
    %v110 = vunpack.c.l.b16 %v62
    %v111 = vunpack.c.l.b16 %v63
    %v112 = vunpack.c.l.b16 %v64
    %v113 = vunpack.c.l.b16 %v65
    %v114 = vpack.c.b16 %v99, %v98
    %v115 = vpack.c.b16 %v101, %v100
    %v116 = vpack.c.b16 %v103, %v102
    %v117 = vpack.c.b16 %v105, %v104
    %v118 = vpack.c.b16 %v107, %v106
    %v119 = vpack.c.b16 %v109, %v108
    %v120 = vpack.c.b16 %v111, %v110
    %v121 = vpack.c.b16 %v113, %v112
    %v146 = vunpack.c.l.b16 %v66
    %v147 = vunpack.c.l.b16 %v67
    %v148 = vunpack.c.l.b16 %v68
    %v149 = vunpack.c.l.b16 %v69
    %v150 = vunpack.c.l.b16 %v70
    %v151 = vunpack.c.l.b16 %v71
    %v152 = vunpack.c.l.b16 %v72
    %v153 = vunpack.c.l.b16 %v73
    %v154 = vunpack.c.l.b16 %v74
    %v155 = vunpack.c.l.b16 %v75
    %v156 = vunpack.c.l.b16 %v76
    %v157 = vunpack.c.l.b16 %v77
    %v158 = vunpack.c.l.b16 %v78
    %v159 = vunpack.c.l.b16 %v79
    %v160 = vunpack.c.l.b16 %v80
    %v161 = vunpack.c.l.b16 %v81
    %v162 = vpack.c.b16 %v147, %v146
    %v163 = vpack.c.b16 %v149, %v148
    %v164 = vpack.c.b16 %v151, %v150
    %v165 = vpack.c.b16 %v153, %v152
    %v166 = vpack.c.b16 %v155, %v154
    %v167 = vpack.c.b16 %v157, %v156
    %v168 = vpack.c.b16 %v159, %v158
    %v169 = vpack.c.b16 %v161, %v160
    %178 = vmatprep.subr.bf16.mxu0 0
    %179 = vmatpush1.bf16.msra.mxu0 %v162
    %180 = vmatprep.subr.bf16.mxu0 0
    %181 = vmatpush1.bf16.msra.mxu0 %v163
    %182 = vmatprep.subr.bf16.mxu0 0
    %183 = vmatpush1.bf16.msra.mxu0 %v164
    %184 = vmatprep.subr.bf16.mxu0 0
    %185 = vmatpush1.bf16.msra.mxu0 %v165
    %186 = vmatprep.subr.bf16.mxu0 0
    %187 = vmatpush1.bf16.msra.mxu0 %v166
    %188 = vmatprep.subr.bf16.mxu0 0
    %189 = vmatpush1.bf16.msra.mxu0 %v167
    %190 = vmatprep.subr.bf16.mxu0 0
    %191 = vmatpush1.bf16.msra.mxu0 %v168
    %192 = vmatprep.subr.bf16.mxu0 0
    %193 = vmatpush1.bf16.msra.mxu0 %v169
    %194 = vmatprep.subr.bf16.mxu0 0
    %195 = vmatpush1.bf16.msra.mxu0 0
    %196 = vmatprep.subr.bf16.mxu0 0
    %197 = vmatpush1.bf16.msra.mxu0 0
    %198 = vmatprep.subr.bf16.mxu0 0
    %199 = vmatpush1.bf16.msra.mxu0 0
    %200 = vmatprep.subr.bf16.mxu0 0
    %201 = vmatpush1.bf16.msra.mxu0 0
    %202 = vmatprep.subr.bf16.mxu0 0
    %203 = vmatpush1.bf16.msra.mxu0 0
    %204 = vmatprep.subr.bf16.mxu0 0
    %205 = vmatpush1.bf16.msra.mxu0 0
    %206 = vmatprep.subr.bf16.mxu0 0
    %207 = vmatpush1.bf16.msra.mxu0 0
    %208 = vmatprep.subr.bf16.mxu0 0
    %209 = vmatpush1.bf16.msra.mxu0 0
    %210 = vmatprep.mubr.bf16.mxu0 0
    %211 = vmatmul.mubr.bf16.gmra.mrb[0].mxu0 %v114
    %v212 = vpop.f32.mrb[0].mxu0
    %v213 = vadd.f32 0.0, %v212
    %v214 = vpop.f32.mrb[0].mxu0
    %v215 = vpop.f32.mrb[0].mxu0
    %v216 = vadd.f32 0.0, %v215
    %v217 = vpop.f32.mrb[0].mxu0
    %218 = vmatprep.mubr.bf16.mxu0 0
    %219 = vmatmul.mubr.bf16.gmra.mrb[0].mxu0 %v115
    %v220 = vpop.f32.mrb[0].mxu0
    %v221 = vadd.f32 0.0, %v220
    %v222 = vpop.f32.mrb[0].mxu0
    %v223 = vpop.f32.mrb[0].mxu0
    %v224 = vadd.f32 0.0, %v223
    %v225 = vpop.f32.mrb[0].mxu0
    %226 = vmatprep.mubr.bf16.mxu0 0
    %227 = vmatmul.mubr.bf16.gmra.mrb[0].mxu0 %v116
    %v228 = vpop.f32.mrb[0].mxu0
    %v229 = vadd.f32 0.0, %v228
    %v230 = vpop.f32.mrb[0].mxu0
    %v231 = vpop.f32.mrb[0].mxu0
    %v232 = vadd.f32 0.0, %v231
    %v233 = vpop.f32.mrb[0].mxu0
    %234 = vmatprep.mubr.bf16.mxu0 0
    %235 = vmatmul.mubr.bf16.gmra.mrb[0].mxu0 %v117
    %v236 = vpop.f32.mrb[0].mxu0
    %v237 = vadd.f32 0.0, %v236
    %v238 = vpop.f32.mrb[0].mxu0
    %v239 = vpop.f32.mrb[0].mxu0
    %v240 = vadd.f32 0.0, %v239
    %v241 = vpop.f32.mrb[0].mxu0
    %242 = vmatprep.mubr.bf16.mxu0 0
    %243 = vmatmul.mubr.bf16.gmra.mrb[0].mxu0 %v118
    %v244 = vpop.f32.mrb[0].mxu0
    %v245 = vadd.f32 0.0, %v244
    %v246 = vpop.f32.mrb[0].mxu0
    %v247 = vpop.f32.mrb[0].mxu0
    %v248 = vadd.f32 0.0, %v247
    %v249 = vpop.f32.mrb[0].mxu0
    %250 = vmatprep.mubr.bf16.mxu0 0
    %251 = vmatmul.mubr.bf16.gmra.mrb[0].mxu0 %v119
    %v252 = vpop.f32.mrb[0].mxu0
    %v253 = vadd.f32 0.0, %v252
    %v254 = vpop.f32.mrb[0].mxu0
    %v255 = vpop.f32.mrb[0].mxu0
    %v256 = vadd.f32 0.0, %v255
    %v257 = vpop.f32.mrb[0].mxu0
    %258 = vmatprep.mubr.bf16.mxu0 0
    %259 = vmatmul.mubr.bf16.gmra.mrb[0].mxu0 %v120
    %v260 = vpop.f32.mrb[0].mxu0
    %v261 = vadd.f32 0.0, %v260
    %v262 = vpop.f32.mrb[0].mxu0
    %v263 = vpop.f32.mrb[0].mxu0
    %v264 = vadd.f32 0.0, %v263
    %v265 = vpop.f32.mrb[0].mxu0
    %266 = vmatprep.mubr.bf16.mxu0 0
    %267 = vmatmul.mubr.bf16.gmra.mrb[0].mxu0 %v121
    %v268 = vpop.f32.mrb[0].mxu0
    %v269 = vadd.f32 0.0, %v268
    %v270 = vpop.f32.mrb[0].mxu0
    %v271 = vpop.f32.mrb[0].mxu0
    %v272 = vadd.f32 0.0, %v271
    %v273 = vpop.f32.mrb[0].mxu0
    %274 = vdwg.mxu0
    %v275 = vld [vmem:[%s2] sm:$0x1]
    %v277 = vlaneseq
    %v278 = vshrl.u32 %v277, 7
    %v279 = vsub.s32 0, %v278
    %v280 = vrot.slane %v275, %v279
    %v282 = vmul.f32 %v213, %v280
    %v283 = vmul.f32 %v216, %v280
    %v284 = vmul.f32 %v221, %v280
    %v285 = vmul.f32 %v224, %v280
    %v286 = vmul.f32 %v229, %v280
    %v287 = vmul.f32 %v232, %v280
    %v288 = vmul.f32 %v237, %v280
    %v289 = vmul.f32 %v240, %v280
    %v290 = vmul.f32 %v245, %v280
    %v291 = vmul.f32 %v248, %v280
    %v292 = vmul.f32 %v253, %v280
    %v293 = vmul.f32 %v256, %v280
    %v294 = vmul.f32 %v261, %v280
    %v295 = vmul.f32 %v264, %v280
    %v296 = vmul.f32 %v269, %v280
    %v297 = vmul.f32 %v272, %v280
    %v298 = vld [vmem:[%s3] sm:$0x1]
    %v300 = vlaneseq
    %v301 = vshrl.u32 %v300, 7
    %v302 = vsub.s32 0, %v301
    %v303 = vrot.slane %v298, %v302
    %v305 = vadd.f32 %v282, %v303
    %v306 = vadd.f32 %v283, %v303
    %v307 = vadd.f32 %v284, %v303
    %v308 = vadd.f32 %v285, %v303
    %v309 = vadd.f32 %v286, %v303
    %v310 = vadd.f32 %v287, %v303
    %v311 = vadd.f32 %v288, %v303
    %v312 = vadd.f32 %v289, %v303
    %v313 = vadd.f32 %v290, %v303
    %v314 = vadd.f32 %v291, %v303
    %v315 = vadd.f32 %v292, %v303
    %v316 = vadd.f32 %v293, %v303
    %v317 = vadd.f32 %v294, %v303
    %v318 = vadd.f32 %v295, %v303
    %v319 = vadd.f32 %v296, %v303
    %v320 = vadd.f32 %v297, %v303
    %vm321 = vcmp.ge.f32.partialorder %v305, 0.0
    %vm322 = vcmp.ge.f32.partialorder %v306, 0.0
    %vm323 = vcmp.ge.f32.partialorder %v307, 0.0
    %vm324 = vcmp.ge.f32.partialorder %v308, 0.0
    %vm325 = vcmp.ge.f32.partialorder %v309, 0.0
    %vm326 = vcmp.ge.f32.partialorder %v310, 0.0
    %vm327 = vcmp.ge.f32.partialorder %v311, 0.0
    %vm328 = vcmp.ge.f32.partialorder %v312, 0.0
    %vm329 = vcmp.ge.f32.partialorder %v313, 0.0
    %vm330 = vcmp.ge.f32.partialorder %v314, 0.0
    %vm331 = vcmp.ge.f32.partialorder %v315, 0.0
    %vm332 = vcmp.ge.f32.partialorder %v316, 0.0
    %vm333 = vcmp.ge.f32.partialorder %v317, 0.0
    %vm334 = vcmp.ge.f32.partialorder %v318, 0.0
    %vm335 = vcmp.ge.f32.partialorder %v319, 0.0
    %vm336 = vcmp.ge.f32.partialorder %v320, 0.0
    %v337 = vmul.f32 %v305, 0.2
    %v338 = vmul.f32 %v306, 0.2
    %v339 = vmul.f32 %v307, 0.2
    %v340 = vmul.f32 %v308, 0.2
    %v341 = vmul.f32 %v309, 0.2
    %v342 = vmul.f32 %v310, 0.2
    %v343 = vmul.f32 %v311, 0.2
    %v344 = vmul.f32 %v312, 0.2
    %v345 = vmul.f32 %v313, 0.2
    %v346 = vmul.f32 %v314, 0.2
    %v347 = vmul.f32 %v315, 0.2
    %v348 = vmul.f32 %v316, 0.2
    %v349 = vmul.f32 %v317, 0.2
    %v350 = vmul.f32 %v318, 0.2
    %v351 = vmul.f32 %v319, 0.2
    %v352 = vmul.f32 %v320, 0.2
    %v353 = vsel %vm321, %v305, %v337
    %v354 = vsel %vm322, %v306, %v338
    %v355 = vsel %vm323, %v307, %v339
    %v356 = vsel %vm324, %v308, %v340
    %v357 = vsel %vm325, %v309, %v341
    %v358 = vsel %vm326, %v310, %v342
    %v359 = vsel %vm327, %v311, %v343
    %v360 = vsel %vm328, %v312, %v344
    %v361 = vsel %vm329, %v313, %v345
    %v362 = vsel %vm330, %v314, %v346
    %v363 = vsel %vm331, %v315, %v347
    %v364 = vsel %vm332, %v316, %v348
    %v365 = vsel %vm333, %v317, %v349
    %v366 = vsel %vm334, %v318, %v350
    %v367 = vsel %vm335, %v319, %v351
    %v368 = vsel %vm336, %v320, %v352
    %v369 = vld [vmem:[%s4] sm:$0x1]
    %vm370 = vcmp.gt.f32.partialorder %v369, 0.0
    %v371 = vsel %vm370, 1, 0
    %v372 = vlaneseq
    %v373 = vshrl.u32 %v372, 7
    %v374 = vsub.s32 0, %v373
    %v375 = vrot.slane %v371, %v374
    %vm376 = vcmp.eq.s32.totalorder %v375, 1
    %v377 = vsel %vm376, %v353, %v305
    %v378 = vsel %vm376, %v354, %v306
    %v379 = vsel %vm376, %v355, %v307
    %v380 = vsel %vm376, %v356, %v308
    %v381 = vsel %vm376, %v357, %v309
    %v382 = vsel %vm376, %v358, %v310
    %v383 = vsel %vm376, %v359, %v311
    %v384 = vsel %vm376, %v360, %v312
    %v385 = vsel %vm376, %v361, %v313
    %v386 = vsel %vm376, %v362, %v314
    %v387 = vsel %vm376, %v363, %v315
    %v388 = vsel %vm376, %v364, %v316
    %v389 = vsel %vm376, %v365, %v317
    %v390 = vsel %vm376, %v366, %v318
    %v391 = vsel %vm376, %v367, %v319
    %v392 = vsel %vm376, %v368, %v320
    %393 = vst [vmem:[#allocation7] sm:$0xff] %v377
    %394 = vst [vmem:[#allocation7 + $0x8] sm:$0xff] %v378
    %395 = vst [vmem:[#allocation7 + $0x10] sm:$0xff] %v379
    %396 = vst [vmem:[#allocation7 + $0x18] sm:$0xff] %v380
    %397 = vst [vmem:[#allocation7 + $0x20] sm:$0xff] %v381
    %398 = vst [vmem:[#allocation7 + $0x28] sm:$0xff] %v382
    %399 = vst [vmem:[#allocation7 + $0x30] sm:$0xff] %v383
    %400 = vst [vmem:[#allocation7 + $0x38] sm:$0xff] %v384
    %401 = vst [vmem:[#allocation7 + $0x40] sm:$0xff] %v385
    %402 = vst [vmem:[#allocation7 + $0x48] sm:$0xff] %v386
    %403 = vst [vmem:[#allocation7 + $0x50] sm:$0xff] %v387
    %404 = vst [vmem:[#allocation7 + $0x58] sm:$0xff] %v388
    %405 = vst [vmem:[#allocation7 + $0x60] sm:$0xff] %v389
    %406 = vst [vmem:[#allocation7 + $0x68] sm:$0xff] %v390
    %407 = vst [vmem:[#allocation7 + $0x70] sm:$0xff] %v391
    %408 = vst [vmem:[#allocation7 + $0x78] sm:$0xff] %v392
    // Predicated region
    $region30: #{tpu_custom_call.1} parent=1 // pred_check
      _
    $region31: #{tpu_custom_call.1} parent=1 // pred_check_branch
      %410 = sbr.rel (0) target = $region33
    $region32: #{tpu_custom_call.1} parent=1 // pred_region
      %s412 = ssub.s32 2048, 2048
      %413 = vsyncadd [#allocation4], %s412
      %s414 = sshll.u32 [#allocation7], 4
      %s415 = int_to_ptr.vmem [resolvable:$true] %s414
      %420 = dma.vmem_to_hbm [thread:$0]  %s415, 2048, %s5, [#allocation4], 128, 128, 8
    $region33: #{tpu_custom_call.1} parent=1 // pred_fallthru
      _
    // Predicated region
    $region34: #{tpu_custom_call.1} parent=1 // pred_check
      _
    $region35: #{tpu_custom_call.1} parent=1 // pred_check_branch
      %422 = sbr.rel (0) target = $region37
    $region36: #{tpu_custom_call.1} parent=1 // pred_region
      %423 = dma.done [#allocation4], 2048
    $region37: #{tpu_custom_call.1} parent=1 // pred_fallthru
      _
    %424 = vsyncpa [#allocation3], 1
    %425 = vsyncpa [#allocation6], 1
    %426 = vsyncpa [#allocation4], 1

</llo_original>
